<compile_context>
chip_gen: v7x
topology: tpu7x:2x2x1
jax: 0.10.0
libtpu: 0.0.40
codegen_flags: <defaults>
</compile_context>

<pallas_src>
import math

import jax
import jax.numpy as jnp
from jax.experimental import pallas as pl
from jax.experimental.pallas import tpu as pltpu

NEG_INF = -1e9
VMEM_LIMIT = 32 * 1024 * 1024  # explicit scoped-VMEM budget, safe on v5e/v6e/v7x


# ----------------------------------------------------------------------------
# tile-size helpers (respect the (8, 128) block constraint)
# ----------------------------------------------------------------------------
def _row_tile(dim, target):
    """Tile for a second-to-last block dim: multiple of 8 that divides dim, <= target."""
    if dim <= target:
        return dim
    t = (min(target, dim) // 8) * 8
    while t >= 8:
        if dim % t == 0:
            return t
        t -= 8
    return dim


def _lane_tile(dim, target):
    """Tile for a last (lane) block dim: multiple of 128 that divides dim, <= target."""
    if dim <= target:
        return dim
    t = (min(target, dim) // 128) * 128
    while t >= 128:
        if dim % t == 0:
            return t
        t -= 128
    return dim


# ----------------------------------------------------------------------------
# Pallas kernels
# ----------------------------------------------------------------------------
def linear_pallas(x, w, b=None, relu=False, out_dtype=jnp.float32,
                  tm=256, tn=512, tk=512):
    """x:(M,K) @ w:(K,N) [+ b:(N,)] with optional fused ReLU.

    bf16 MXU operands, f32 VMEM accumulator over a K reduction grid axis,
    N tiled so large weights (e.g. tied-embedding (H, V)) stream through VMEM.
    """
    M, K = x.shape
    N = w.shape[1]
    TM = _row_tile(M, tm)
    TN = _lane_tile(N, tn)
    TK = _lane_tile(K, tk)
    x = x.astype(jnp.bfloat16)
    w = w.astype(jnp.bfloat16)
    has_bias = b is not None

    def kernel(*refs):
        if has_bias:
            x_ref, w_ref, b_ref, o_ref, acc_ref = refs
        else:
            x_ref, w_ref, o_ref, acc_ref = refs
        kk = pl.program_id(2)

        @pl.when(kk == 0)
        def _():
            acc_ref[...] = jnp.zeros_like(acc_ref)

        acc_ref[...] += jnp.dot(x_ref[...], w_ref[...],
                                preferred_element_type=jnp.float32)

        @pl.when(kk == pl.num_programs(2) - 1)
        def _():
            r = acc_ref[...]
            if has_bias:
                r = r + b_ref[...]
            if relu:
                r = jnp.maximum(r, 0.0)
            o_ref[...] = r.astype(o_ref.dtype)

    in_specs = [
        pl.BlockSpec((TM, TK), lambda i, j, k: (i, k)),
        pl.BlockSpec((TK, TN), lambda i, j, k: (k, j)),
    ]
    args = [x, w]
    if has_bias:
        in_specs.append(pl.BlockSpec((1, TN), lambda i, j, k: (0, j)))
        args.append(b.astype(jnp.float32).reshape(1, N))

    return pl.pallas_call(
        kernel,
        out_shape=jax.ShapeDtypeStruct((M, N), out_dtype),
        grid=(M // TM, N // TN, K // TK),
        in_specs=in_specs,
        out_specs=pl.BlockSpec((TM, TN), lambda i, j, k: (i, j)),
        scratch_shapes=[pltpu.VMEM((TM, TN), jnp.float32)],
        compiler_params=pltpu.CompilerParams(
            dimension_semantics=("parallel", "parallel", "arbitrary"),
            vmem_limit_bytes=VMEM_LIMIT),
    )(*args)


def ffn_pallas(x, w1, b1, w2, b2, out_dtype=jnp.float32, tm=256, tf=512):
    """Fused FFN: relu(x @ w1 + b1) @ w2 + b2, intermediate kept in VMEM.

    Grid = (M tiles, F tiles); F is the streamed reduction axis of the second
    matmul, so the (M, F) activation never touches HBM.
    """
    M, H = x.shape
    F = w1.shape[1]
    TM = _row_tile(M, tm)
    TF = _lane_tile(F, tf)
    x = x.astype(jnp.bfloat16)
    w1 = w1.astype(jnp.bfloat16)
    w2 = w2.astype(jnp.bfloat16)

    def kernel(x_ref, w1_ref, b1_ref, w2_ref, b2_ref, o_ref, acc_ref):
        f = pl.program_id(1)

        @pl.when(f == 0)
        def _():
            acc_ref[...] = jnp.zeros_like(acc_ref)

        h = jnp.dot(x_ref[...], w1_ref[...], preferred_element_type=jnp.float32)
        h = jnp.maximum(h + b1_ref[...], 0.0)
        acc_ref[...] += jnp.dot(h.astype(jnp.bfloat16), w2_ref[...],
                                preferred_element_type=jnp.float32)

        @pl.when(f == pl.num_programs(1) - 1)
        def _():
            o_ref[...] = (acc_ref[...] + b2_ref[...]).astype(o_ref.dtype)

    return pl.pallas_call(
        kernel,
        out_shape=jax.ShapeDtypeStruct((M, H), out_dtype),
        grid=(M // TM, F // TF),
        in_specs=[
            pl.BlockSpec((TM, H), lambda i, f: (i, 0)),
            pl.BlockSpec((H, TF), lambda i, f: (0, f)),
            pl.BlockSpec((1, TF), lambda i, f: (0, f)),
            pl.BlockSpec((TF, H), lambda i, f: (f, 0)),
            pl.BlockSpec((1, H), lambda i, f: (0, 0)),
        ],
        out_specs=pl.BlockSpec((TM, H), lambda i, f: (i, 0)),
        scratch_shapes=[pltpu.VMEM((TM, H), jnp.float32)],
        compiler_params=pltpu.CompilerParams(
            dimension_semantics=("parallel", "arbitrary"),
            vmem_limit_bytes=VMEM_LIMIT),
    )(x, w1, b1.astype(jnp.float32).reshape(1, F), w2,
      b2.astype(jnp.float32).reshape(1, H))


def add_layernorm_pallas(x, res, gamma, beta, eps=1e-5, tm=512):
    """Fused (x + res) followed by row-wise LayerNorm over last dim. x,res:(M,H) f32."""
    M, H = x.shape
    TM = _row_tile(M, tm)

    def kernel(x_ref, r_ref, g_ref, b_ref, o_ref):
        xv = x_ref[...].astype(jnp.float32) + r_ref[...].astype(jnp.float32)
        mu = jnp.mean(xv, axis=-1, keepdims=True)
        var = jnp.mean(jnp.square(xv - mu), axis=-1, keepdims=True)
        y = (xv - mu) * jax.lax.rsqrt(var + eps)
        o_ref[...] = (y * g_ref[...] + b_ref[...]).astype(o_ref.dtype)

    return pl.pallas_call(
        kernel,
        out_shape=jax.ShapeDtypeStruct((M, H), jnp.float32),
        grid=(M // TM,),
        in_specs=[
            pl.BlockSpec((TM, H), lambda i: (i, 0)),
            pl.BlockSpec((TM, H), lambda i: (i, 0)),
            pl.BlockSpec((1, H), lambda i: (0, 0)),
            pl.BlockSpec((1, H), lambda i: (0, 0)),
        ],
        out_specs=pl.BlockSpec((TM, H), lambda i: (i, 0)),
        compiler_params=pltpu.CompilerParams(
            dimension_semantics=("parallel",), vmem_limit_bytes=VMEM_LIMIT),
    )(x, res, gamma.reshape(1, H), beta.reshape(1, H))


def attention_pallas(q, k, v, mask_add):
    """Fused softmax(QK^T*scale + mask)V, all heads per grid step.

    q,k,v : (B, nh, S, Dh) bf16.
    mask  : (B, Sq_m, Sk) f32 with Sq_m in {1, Sq} (NOT replicated per head;
            broadcast over heads / query rows inside the kernel).
    out   : (B, Sq, nh*Dh) f32 — lane-dense, directly consumable by the out projection.
    """
    B, nh, Sq, Dh = q.shape
    Sk = k.shape[2]
    Sq_m = mask_add.shape[1]
    H = nh * Dh
    scale = 1.0 / math.sqrt(Dh)

    def kernel(q_ref, k_ref, v_ref, m_ref, o_ref):
        s = jnp.einsum('hqd,hkd->hqk', q_ref[0], k_ref[0],
                       preferred_element_type=jnp.float32) * scale
        s = s + m_ref[...]                               # (1,Sq_m,Sk) broadcast over heads
        mx = jnp.max(s, axis=-1, keepdims=True)
        p = jnp.exp(s - mx)
        denom = jnp.sum(p, axis=-1, keepdims=True)
        p = p * pl.reciprocal(denom, approx=True)        # EUP slot, off the VALU
        o = jnp.einsum('hqk,hkd->hqd', p.astype(v_ref.dtype), v_ref[0],
                       preferred_element_type=jnp.float32)   # (nh, Sq, Dh) f32
        for h in range(nh):                              # lane-dense (Sq, H) store
            o_ref[0, :, h * Dh:(h + 1) * Dh] = o[h].astype(o_ref.dtype)

    return pl.pallas_call(
        kernel,
        out_shape=jax.ShapeDtypeStruct((B, Sq, H), jnp.float32),
        grid=(B,),
        in_specs=[
            pl.BlockSpec((1, nh, Sq, Dh), lambda b: (b, 0, 0, 0)),
            pl.BlockSpec((1, nh, Sk, Dh), lambda b: (b, 0, 0, 0)),
            pl.BlockSpec((1, nh, Sk, Dh), lambda b: (b, 0, 0, 0)),
            pl.BlockSpec((1, Sq_m, Sk), lambda b: (b, 0, 0)),
        ],
        out_specs=pl.BlockSpec((1, Sq, H), lambda b: (b, 0, 0)),
        compiler_params=pltpu.CompilerParams(
            dimension_semantics=("parallel",), vmem_limit_bytes=VMEM_LIMIT),
    )(q, k, v, mask_add)


def smooth_loss_pallas(logits, labels, pad_id, eps):
    """Fused log_softmax + label-smoothed NLL, summed over non-pad tokens.

    logits:(M,V) f32, labels:(M,) int. Row-tiled with a resident (1,1) accumulator
    output block (init on first tile, accumulate across tiles). Equivalent to
    F.log_softmax(logit,-1).transpose(1,2) + smooth_loss(..., pad, eps) with
    fairseq-style smoothing: (1-eps)*nll + (eps/V)*(-sum(logp)).
    """
    M, V = logits.shape
    labels2 = labels.reshape(M, 1).astype(jnp.int32)
    # Keep the (TM, V) f32 tile around 4 MiB so it fits v7x's tighter VMEM too.
    tm_target = max(8, min(512, (4 * 1024 * 1024) // (V * 4)))
    TM = _row_tile(M, tm_target)

    def kernel(l_ref, y_ref, o_ref):
        i = pl.program_id(0)

        @pl.when(i == 0)
        def _():
            o_ref[...] = jnp.zeros_like(o_ref)

        s = l_ref[...].astype(jnp.float32)
        lbl = y_ref[...]
        mx = jnp.max(s, axis=-1, keepdims=True)
        z = s - mx
        lse = jnp.log(jnp.sum(jnp.exp(z), axis=-1, keepdims=True))
        lp = z - lse                                                # log_softmax (TM,V)
        iota = jax.lax.broadcasted_iota(jnp.int32, (TM, V), 1)
        nll = -jnp.sum(jnp.where(iota == lbl, lp, 0.0), axis=-1, keepdims=True)  # (TM,1)
        smooth = -jnp.sum(lp, axis=-1, keepdims=True)               # (TM,1)
        valid = (lbl != pad_id).astype(jnp.float32)
        per_tok = (1.0 - eps) * nll + (eps / V) * smooth
        o_ref[...] += jnp.sum(per_tok * valid, keepdims=True)

    out = pl.pallas_call(
        kernel,
        out_shape=jax.ShapeDtypeStruct((1, 1), jnp.float32),
        grid=(M // TM,),
        in_specs=[
            pl.BlockSpec((TM, V), lambda i: (i, 0)),
            pl.BlockSpec((TM, 1), lambda i: (i, 0)),
        ],
        out_specs=pl.BlockSpec((1, 1), lambda i: (0, 0)),
        compiler_params=pltpu.CompilerParams(
            dimension_semantics=("arbitrary",), vmem_limit_bytes=VMEM_LIMIT),
    )(logits, labels2)
    return out[0, 0]


# ----------------------------------------------------------------------------
# Model glue (plain JAX)
# ----------------------------------------------------------------------------
def sinusoid_pos_emb(positions, H):
    # Standard sinusoidal positional embedding (assumed implementation of PositionEmbedding).
    pos = positions.astype(jnp.float32)[:, None]
    i = jnp.arange(H // 2, dtype=jnp.float32)[None, :]
    inv_freq = jnp.exp(-jnp.log(10000.0) * (2.0 * i / H))
    ang = pos * inv_freq
    return jnp.concatenate([jnp.sin(ang), jnp.cos(ang)], axis=-1)


def embed(ids, emb_w, H, pos=None, seg_id=None, seg_emb=None):
    B, L = ids.shape
    e = emb_w[ids] * (H ** 0.5)
    if pos is not None:
        pe = sinusoid_pos_emb(pos.reshape(-1), H).reshape(B, L, H)
    else:
        pe = jnp.broadcast_to(sinusoid_pos_emb(jnp.arange(L), H)[None], (B, L, H))
    if seg_id is not None:
        pe = pe + seg_emb[seg_id]
    return e + pe  # dropout: eval mode -> identity


def mha(x_q, x_kv, p, mask_add, nh):
    B, Sq, H = x_q.shape
    Sk = x_kv.shape[1]
    Dh = H // nh
    xq = x_q.reshape(B * Sq, H).astype(jnp.bfloat16)
    xkv = x_kv.reshape(B * Sk, H).astype(jnp.bfloat16)

    def heads(y, L):
        return y.reshape(B, L, nh, Dh).transpose(0, 2, 1, 3)   # (B, nh, L, Dh)

    q = heads(linear_pallas(xq, p['q']['w'], p['q']['b'], out_dtype=jnp.bfloat16), Sq)
    k = heads(linear_pallas(xkv, p['k']['w'], p['k']['b'], out_dtype=jnp.bfloat16), Sk)
    v = heads(linear_pallas(xkv, p['v']['w'], p['v']['b'], out_dtype=jnp.bfloat16), Sk)
    o = attention_pallas(q, k, v, mask_add)                    # (B, Sq, H) f32, lane-dense
    return linear_pallas(o.reshape(B * Sq, H), p['o']['w'], p['o']['b']).reshape(B, Sq, H)


def encoder_layer(x, p, mask_add, nh):
    # Post-LN transformer encoder layer (standard assumption for TransformerEncoder).
    B, S, H = x.shape
    a = mha(x, x, p['attn'], mask_add, nh)
    x = add_layernorm_pallas(x.reshape(-1, H), a.reshape(-1, H),
                             p['ln1']['g'], p['ln1']['b']).reshape(B, S, H)
    h = ffn_pallas(x.reshape(-1, H), p['ffn1']['w'], p['ffn1']['b'],
                   p['ffn2']['w'], p['ffn2']['b'])
    x = add_layernorm_pallas(x.reshape(-1, H), h,
                             p['ln2']['g'], p['ln2']['b']).reshape(B, S, H)
    return x


def decoder_layer(x, src_enc, p, tgt_mask_add, cross_mask_add, nh):
    # Non-causal decoder layer (RecoverSAT: causal=False; causality via segment mask).
    B, T, H = x.shape
    a = mha(x, x, p['self'], tgt_mask_add, nh)
    x = add_layernorm_pallas(x.reshape(-1, H), a.reshape(-1, H),
                             p['ln1']['g'], p['ln1']['b']).reshape(B, T, H)
    c = mha(x, src_enc, p['cross'], cross_mask_add, nh)
    x = add_layernorm_pallas(x.reshape(-1, H), c.reshape(-1, H),
                             p['ln2']['g'], p['ln2']['b']).reshape(B, T, H)
    h = ffn_pallas(x.reshape(-1, H), p['ffn1']['w'], p['ffn1']['b'],
                   p['ffn2']['w'], p['ffn2']['b'])
    x = add_layernorm_pallas(x.reshape(-1, H), h,
                             p['ln3']['g'], p['ln3']['b']).reshape(B, T, H)
    return x


def segment_mask_fn(tgt_len, max_len, seg_num, seg_lens=None):
    # TODO(synk): original segment_mask source unavailable; assume equal-length contiguous
    # segments with within-segment-offset causal visibility across all segments (RecoverSAT).
    seg_len = max_len // seg_num
    r = jnp.arange(max_len) % seg_len
    allowed = (r[None, :] <= r[:, None]).astype(jnp.float32)   # (T,T), 1 = visible
    B = tgt_len.shape[0]
    return jnp.broadcast_to(allowed[None], (B, max_len, max_len))


def recoversat_forward(params, cfg, src_seq, tgt_seq, src_lens, label, seg_id, tgt_pos):
    H, nh, V = cfg['hidden'], cfg['heads'], cfg['vocab']
    B, S = src_seq.shape
    T = tgt_seq.shape[1]

    # ---------------- encode ----------------
    src_emb = embed(src_seq, params['emb'], H)                          # (B,S,H)
    src_key_pad = jnp.arange(S)[None, :] >= src_lens[:, None]           # (B,S) True = pad
    # Key-padding mask kept as (B,1,S); broadcast over query rows / heads happens in-kernel.
    src_mask_add = jnp.where(src_key_pad, NEG_INF, 0.0).astype(jnp.float32)[:, None, :]
    x = src_emb
    for layer in params['enc']:
        x = encoder_layer(x, layer, src_mask_add, nh)
    src_enc = x

    # ---------------- decode ----------------
    pad_id, eos_id, del_id = cfg['pad'], cfg['eos'], cfg['delete']
    special = (tgt_seq == pad_id) | (tgt_seq == eos_id) | (tgt_seq == del_id)
    tgt_len = T - jnp.sum(special, axis=-1)                             # (B,)
    seg_allowed = segment_mask_fn(tgt_len, T, cfg['seg_num'])           # (B,T,T)
    tgt_mask_add = (1.0 - seg_allowed) * NEG_INF                        # 1 - segment_mask

    tgt_emb = embed(tgt_seq, params['emb'], H, pos=tgt_pos, seg_id=seg_id,
                    seg_emb=params['seg_emb'])
    cross_mask_add = src_mask_add                                       # (B,1,S), reused
    y = tgt_emb
    for layer in params['dec']:
        y = decoder_layer(y, src_enc, layer, tgt_mask_add, cross_mask_add, nh)

    # logit = F.linear(tgt_dec, tgt_embedding.weight)  (tied weights, no bias):
    # pre-transposed bf16 copy of the embedding, no zero-bias pass.
    logits = linear_pallas(y.reshape(-1, H), params['emb_T'], b=None)   # (B*T, V) f32
    # log_softmax + transpose(1,2) + smooth_loss fused in the Pallas loss kernel.
    loss = smooth_loss_pallas(logits, label.reshape(-1), pad_id, cfg['smooth'])
    return loss


# ----------------------------------------------------------------------------
# Deterministic parameter init (synthetic; mirrors module shapes)
# ----------------------------------------------------------------------------
def init_params(key, cfg):
    V, H, F, nh = cfg['vocab'], cfg['hidden'], cfg['ffn'], cfg['heads']
    keys = iter(jax.random.split(key, 256))

    def dense(din, dout):
        # MXU operand weights stored in bf16 (f32 accumulation happens in-kernel);
        # biases / LN params / softmax math stay f32 (v5e VPU has no bf16).
        w = jax.random.normal(next(keys), (din, dout), jnp.float32) * 0.02
        return {'w': w.astype(jnp.bfloat16), 'b': jnp.zeros((dout,), jnp.float32)}

    def attn_block():
        return {'q': dense(H, H), 'k': dense(H, H), 'v': dense(H, H), 'o': dense(H, H)}

    def ln():
        return {'g': jnp.ones((H,), jnp.float32), 'b': jnp.zeros((H,), jnp.float32)}

    emb = jax.random.normal(next(keys), (V, H), jnp.float32) * 0.02
    emb = emb.at[cfg['pad']].set(0.0)                      # padding_idx row zeroed
    emb_T = emb.T.astype(jnp.bfloat16)                     # tied logit weight, pre-transposed
    seg_emb = jax.random.normal(next(keys), (cfg['seg_num'], H), jnp.float32) * 0.02

    enc = [{'attn': attn_block(), 'ln1': ln(),
            'ffn1': dense(H, F), 'ffn2': dense(F, H), 'ln2': ln()}
           for _ in range(cfg['enc_layers'])]
    dec = [{'self': attn_block(), 'ln1': ln(),
            'cross': attn_block(), 'ln2': ln(),
            'ffn1': dense(H, F), 'ffn2': dense(F, H), 'ln3': ln()}
           for _ in range(cfg['dec_layers'])]
    return {'emb': emb, 'emb_T': emb_T, 'seg_emb': seg_emb, 'enc': enc, 'dec': dec}


# ----------------------------------------------------------------------------
if __name__ == "__main__":
    cfg = dict(vocab=64, hidden=32, heads=4, ffn=64, enc_layers=2, dec_layers=2,
               seg_num=2, pad=0, eos=2, delete=3, smooth=0.15)

    key = jax.random.PRNGKey(0)
    pkey, dkey = jax.random.split(key)
    params = init_params(pkey, cfg)

    B, S_src, T = 2, 16, 16
    k1, k2, k3 = jax.random.split(dkey, 3)
    src_seq = jax.random.randint(k1, (B, S_src), 4, cfg['vocab'], dtype=jnp.int32)
    src_lens = jnp.array([16, 12], dtype=jnp.int32)
    src_seq = jnp.where(jnp.arange(S_src)[None, :] < src_lens[:, None], src_seq, cfg['pad'])

    tgt_seq = jax.random.randint(k2, (B, T), 4, cfg['vocab'], dtype=jnp.int32)
    label = jax.random.randint(k3, (B, T), 4, cfg['vocab'], dtype=jnp.int32)

    seg_len = T // cfg['seg_num']
    seg_id = jnp.broadcast_to(
        jnp.repeat(jnp.arange(cfg['seg_num'], dtype=jnp.int32), seg_len)[None], (B, T))
    tgt_pos = jnp.broadcast_to(
        jnp.tile(jnp.arange(seg_len, dtype=jnp.int32), cfg['seg_num'])[None], (B, T))

    # forward(): src_seq = src_seq[:, :max_len]  (dynamic shape glue, done in Python)
    max_len = max(int(src_lens.max()), 1)
    src_seq = src_seq[:, :max_len]

    loss = recoversat_forward(params, cfg, src_seq, tgt_seq, src_lens, label, seg_id, tgt_pos)
    jax.block_until_ready(loss)
    assert loss.shape == () and jnp.isfinite(loss)
    print("KERNEL_OK")
</pallas_src>

<mosaic_0001>
module attributes {stable_mosaic.version = 11 : i64} {
  func.func @kernel(%arg0: i32, %arg1: i32, %arg2: i32, %arg3: memref<32x32xbf16, #tpu.memory_space<vmem>>, %arg4: memref<32x32xbf16, #tpu.memory_space<vmem>>, %arg5: memref<1x32xf32, #tpu.memory_space<vmem>>, %arg6: memref<32x32xbf16, #tpu.memory_space<vmem>>, %arg7: memref<32x32xf32, #tpu.memory_space<vmem>>) attributes {dimension_semantics = [#tpu.dimension_semantics<parallel>, #tpu.dimension_semantics<parallel>, #tpu.dimension_semantics<arbitrary>], iteration_bounds = array<i64: 1, 1, 1>, scalar_prefetch = 0 : i64, scratch_operands = 1 : i64, tpu.core_type = #tpu.core_type<tc>, window_params = [{transform_indices = @transform_0, window_bounds = array<i64: 32, 32>}, {transform_indices = @transform_1, window_bounds = array<i64: 32, 32>}, {transform_indices = @transform_2, window_bounds = array<i64: 1, 32>}, {transform_indices = @transform_3, window_bounds = array<i64: 32, 32>}]} {
    %c0_i32 = arith.constant 0 : i32
    %0 = arith.cmpi eq, %arg2, %c0_i32 : i32
    %1 = arith.extui %0 : i1 to i32
    %c0_i32_0 = arith.constant 0 : i32
    %2 = arith.cmpi ne, %1, %c0_i32_0 : i32
    scf.if %2 {
      %cst_10 = arith.constant 0.000000e+00 : f32
      %12 = vector.broadcast %cst_10 : f32 to vector<32x32xf32>
      %c0_11 = arith.constant 0 : index
      %c0_12 = arith.constant 0 : index
      %13 = vector.load %arg7[%c0_11, %c0_12] : memref<32x32xf32, #tpu.memory_space<vmem>>, vector<32x32xf32>
      tpu.vector_store %arg7[%c0_11, %c0_12], %12 {strides = array<i32>} : memref<32x32xf32, #tpu.memory_space<vmem>>, vector<32x32xf32>,
    } else {
    }
    %c0 = arith.constant 0 : index
    %c0_1 = arith.constant 0 : index
    %3 = vector.load %arg7[%c0, %c0_1] : memref<32x32xf32, #tpu.memory_space<vmem>>, vector<32x32xf32>
    %c0_2 = arith.constant 0 : index
    %c0_3 = arith.constant 0 : index
    %4 = vector.load %arg3[%c0_2, %c0_3] : memref<32x32xbf16, #tpu.memory_space<vmem>>, vector<32x32xbf16>
    %c0_4 = arith.constant 0 : index
    %c0_5 = arith.constant 0 : index
    %5 = vector.load %arg4[%c0_4, %c0_5] : memref<32x32xbf16, #tpu.memory_space<vmem>>, vector<32x32xbf16>
    %cst = arith.constant dense<0.000000e+00> : vector<32x32xf32>
    %6 = tpu.matmul %4, %5, %cst {dimension_numbers = #tpu.dot_dimension_numbers<[1], [0], [0], [1], [0, 0, 1, 1], [], []>} : vector<32x32xbf16>, vector<32x32xbf16>, vector<32x32xf32> -> vector<32x32xf32>
    %7 = arith.addf %3, %6 : vector<32x32xf32>
    %c0_6 = arith.constant 0 : index
    %c0_7 = arith.constant 0 : index
    %8 = vector.load %arg7[%c0_6, %c0_7] : memref<32x32xf32, #tpu.memory_space<vmem>>, vector<32x32xf32>
    tpu.vector_store %arg7[%c0_6, %c0_7], %7 {strides = array<i32>} : memref<32x32xf32, #tpu.memory_space<vmem>>, vector<32x32xf32>,
    %c0_i32_8 = arith.constant 0 : i32
    %9 = arith.cmpi eq, %arg2, %c0_i32_8 : i32
    %10 = arith.extui %9 : i1 to i32
    %c0_i32_9 = arith.constant 0 : i32
    %11 = arith.cmpi ne, %10, %c0_i32_9 : i32
    scf.if %11 {
      %c0_10 = arith.constant 0 : index
      %c0_11 = arith.constant 0 : index
      %12 = vector.load %arg7[%c0_10, %c0_11] : memref<32x32xf32, #tpu.memory_space<vmem>>, vector<32x32xf32>
      %c0_12 = arith.constant 0 : index
      %c0_13 = arith.constant 0 : index
      %13 = vector.load %arg5[%c0_12, %c0_13] : memref<1x32xf32, #tpu.memory_space<vmem>>, vector<1x32xf32>
      %14 = vector.broadcast %13 : vector<1x32xf32> to vector<32x32xf32>
      %15 = arith.addf %12, %14 : vector<32x32xf32>
      %16 = arith.truncf %15 : vector<32x32xf32> to vector<32x32xbf16>
      %c0_14 = arith.constant 0 : index
      %c0_15 = arith.constant 0 : index
      %17 = vector.load %arg6[%c0_14, %c0_15] : memref<32x32xbf16, #tpu.memory_space<vmem>>, vector<32x32xbf16>
      tpu.vector_store %arg6[%c0_14, %c0_15], %16 {strides = array<i32>} : memref<32x32xbf16, #tpu.memory_space<vmem>>, vector<32x32xbf16>,
    } else {
    }
    return
  }
  func.func @transform_0(%arg0: i32, %arg1: i32, %arg2: i32) -> (i32, i32) {
    %c0_i32 = arith.constant 0 : i32
    return %arg0, %arg2 : i32, i32
  }
  func.func @transform_1(%arg0: i32, %arg1: i32, %arg2: i32) -> (i32, i32) {
    %c0_i32 = arith.constant 0 : i32
    return %arg2, %arg1 : i32, i32
  }
  func.func @transform_2(%arg0: i32, %arg1: i32, %arg2: i32) -> (i32, i32) {
    %c0_i32 = arith.constant 0 : i32
    %c0_i32_0 = arith.constant 0 : i32
    return %c0_i32, %arg1 : i32, i32
  }
  func.func @transform_3(%arg0: i32, %arg1: i32, %arg2: i32) -> (i32, i32) {
    %c0_i32 = arith.constant 0 : i32
    return %arg0, %arg1 : i32, i32
  }
}

</mosaic_0001>

<llo_original>
// kernel: tpu_custom_call.1
$region0: #{tpu_custom_call.1}
  #allocation0 [shape = 'u32[]', space=smem, size = 0x4, offset = 0x4, fixed_abs, tag = 'smem constant byte address 0x4 - core index']
  #allocation1 [shape = 'u32[144,128]{1,0:T(1,128)}', space=vmem, size = 0x12000, scoped, tag = 'internal scratch']
  #allocation2 [shape = 'f32[32,32]{1,0:T(8,128)}', space=vmem, size = 0x4000, scoped, tag = 'scratch operand']
  %s0 = inlined_call_operand.hbm [shape: bf16[32,32], index: 0, kind: input, shape index: {}]
  %s1 = inlined_call_operand.hbm [shape: bf16[32,32], index: 1, kind: input, shape index: {}]
  %s2 = inlined_call_operand.vmem [shape: f32[1,32], index: 2, kind: input, shape index: {}]
  %s3 = inlined_call_operand.hbm [shape: bf16[32,32], index: 3, kind: output, shape index: {}]
  %s4 = sld [smem:[#allocation0]]
  $region38: #{tpu_custom_call.1} parent=0
    _
  %s6 = ssub.s32 1, %s4
  %s7 = scalar_select 0, %s6, %s4
  $region1: #{tpu_custom_call.1} parent=0
    #allocation3 [shape = 'u8[8192]{0}', space=vmem, size = 0x2000, scoped, tag = 'input window, operand 0, single buffered']
    #allocation4 [shape = 's32[1]{0}', space=sflag, size = 0x4, scoped, tag = 'scoped memory for tpu_custom_call.1']
    #allocation5 [shape = 's32[1]{0}', space=sflag, size = 0x4, scoped, tag = 'scoped memory for tpu_custom_call.1']
    #allocation6 [shape = 'u8[8192]{0}', space=vmem, size = 0x2000, scoped, tag = 'input window, operand 1, single buffered']
    #allocation7 [shape = 's32[1]{0}', space=sflag, size = 0x4, scoped, tag = 'scoped memory for tpu_custom_call.1']
    #allocation8 [shape = 'u8[8192]{0}', space=vmem, size = 0x2000, scoped, tag = 'output window, operand 0, single buffered']
    %8 = vsyncpa [#allocation4], 0
    %9 = vsyncpa [#allocation7], 0
    %10 = vsyncpa [#allocation5], 0
    // Predicated region
    $region2: #{tpu_custom_call.1} parent=1 // pred_check
      _
    $region3: #{tpu_custom_call.1} parent=1 // pred_check_branch
      %12 = sbr.rel (0) target = $region5
    $region4: #{tpu_custom_call.1} parent=1 // pred_region
      %s14 = ssub.s32 256, 256
      %15 = vsyncadd [#allocation4], %s14
      %s16 = sshll.u32 [#allocation3], 4
      %s17 = int_to_ptr.vmem [resolvable:$true] %s16
      %22 = dma.hbm_to_vmem [thread:$0]  %s0, 256, %s17, [#allocation4], 64, 64, 4
    $region5: #{tpu_custom_call.1} parent=1 // pred_fallthru
      _
    // Predicated region
    $region6: #{tpu_custom_call.1} parent=1 // pred_check
      _
    $region7: #{tpu_custom_call.1} parent=1 // pred_check_branch
      %24 = sbr.rel (0) target = $region9
    $region8: #{tpu_custom_call.1} parent=1 // pred_region
      %s26 = ssub.s32 256, 256
      %27 = vsyncadd [#allocation7], %s26
      %s28 = sshll.u32 [#allocation6], 4
      %s29 = int_to_ptr.vmem [resolvable:$true] %s28
      %34 = dma.hbm_to_vmem [thread:$0]  %s1, 256, %s29, [#allocation7], 64, 64, 4
    $region9: #{tpu_custom_call.1} parent=1 // pred_fallthru
      _
    // Predicated region
    $region10: #{tpu_custom_call.1} parent=1 // pred_check
      _
    $region11: #{tpu_custom_call.1} parent=1 // pred_check_branch
      %36 = sbr.rel (0) target = $region13
    $region12: #{tpu_custom_call.1} parent=1 // pred_region
      _
    $region13: #{tpu_custom_call.1} parent=1 // pred_fallthru
      _
    // Predicated region
    $region14: #{tpu_custom_call.1} parent=1 // pred_check
      _
    $region15: #{tpu_custom_call.1} parent=1 // pred_check_branch
      %38 = sbr.rel (0) target = $region17
    $region16: #{tpu_custom_call.1} parent=1 // pred_region
      %39 = dma.done [#allocation4], 256
    $region17: #{tpu_custom_call.1} parent=1 // pred_fallthru
      _
    // Predicated region
    $region18: #{tpu_custom_call.1} parent=1 // pred_check
      _
    $region19: #{tpu_custom_call.1} parent=1 // pred_check_branch
      %41 = sbr.rel (0) target = $region21
    $region20: #{tpu_custom_call.1} parent=1 // pred_region
      %42 = dma.done [#allocation7], 256
    $region21: #{tpu_custom_call.1} parent=1 // pred_fallthru
      _
    %p44 = scmp.eq.s32.totalorder 0, 0
    // Predicated region
    $region22: #{tpu_custom_call.1} parent=1 // pred_check
      %p45 = pneg %p44
    $region23: #{tpu_custom_call.1} parent=1 // pred_check_branch
      %47 = sbr.rel (%p45) target = $region25
    $region24: #{tpu_custom_call.1} parent=1 // pred_region
      %vm48 = vcmask 261120
      %49 = vst.msk [vmem:[#allocation2] sm:$0xff] %vm48, 0.0
      %50 = vst.msk [vmem:[#allocation2 + $0x8] sm:$0xff] %vm48, 0.0
      %51 = vst.msk [vmem:[#allocation2 + $0x10] sm:$0xff] %vm48, 0.0
      %52 = vst.msk [vmem:[#allocation2 + $0x18] sm:$0xff] %vm48, 0.0
    $region25: #{tpu_custom_call.1} parent=1 // pred_fallthru
      _
    %v53 = vld [vmem:[#allocation2] sm:$0xff]
    %v54 = vld [vmem:[#allocation2 + $0x8] sm:$0xff]
    %v55 = vld [vmem:[#allocation2 + $0x10] sm:$0xff]
    %v56 = vld [vmem:[#allocation2 + $0x18] sm:$0xff]
    %v57 = vld [vmem:[#allocation3] sm:$0xf]
    %v58 = vld [vmem:[#allocation3 + $0x4] sm:$0xf]
    %v59 = vld [vmem:[#allocation3 + $0x8] sm:$0xf]
    %v60 = vld [vmem:[#allocation3 + $0xc] sm:$0xf]
    %v61 = vld [vmem:[#allocation6] sm:$0xf]
    %v62 = vld [vmem:[#allocation6 + $0x4] sm:$0xf]
    %v63 = vld [vmem:[#allocation6 + $0x8] sm:$0xf]
    %v64 = vld [vmem:[#allocation6 + $0xc] sm:$0xf]
    %v69 = vunpack.c.l.b16 %v57
    %v70 = vunpack.c.l.b16 %v58
    %v71 = vunpack.c.l.b16 %v59
    %v72 = vunpack.c.l.b16 %v60
    %v73 = vpack.c.b16 %v70, %v69
    %v74 = vpack.c.b16 %v72, %v71
    %v79 = vunpack.c.l.b16 %v61
    %v80 = vunpack.c.l.b16 %v62
    %v81 = vunpack.c.l.b16 %v63
    %v82 = vunpack.c.l.b16 %v64
    %v83 = vpack.c.b16 %v80, %v79
    %v84 = vpack.c.b16 %v82, %v81
    %vm87 = vcmask 261120
    %v89 = vsel %vm87, %v73, 0
    %v92 = vsel %vm87, %v74, 0
    %94 = vmatprep.subr.bf16.mxu0 0
    %95 = vmatpush1.bf16.msra.mxu0 %v83
    %96 = vmatprep.subr.bf16.mxu0 0
    %97 = vmatpush1.bf16.msra.mxu0 %v84
    %98 = vmatprep.subr.bf16.mxu0 0
    %99 = vmatpush1.bf16.msra.mxu0 0
    %100 = vmatprep.subr.bf16.mxu0 0
    %101 = vmatpush1.bf16.msra.mxu0 0
    %102 = vmatprep.subr.bf16.mxu0 0
    %103 = vmatpush1.bf16.msra.mxu0 0
    %104 = vmatprep.subr.bf16.mxu0 0
    %105 = vmatpush1.bf16.msra.mxu0 0
    %106 = vmatprep.subr.bf16.mxu0 0
    %107 = vmatpush1.bf16.msra.mxu0 0
    %108 = vmatprep.subr.bf16.mxu0 0
    %109 = vmatpush1.bf16.msra.mxu0 0
    %110 = vmatprep.subr.bf16.mxu0 0
    %111 = vmatpush1.bf16.msra.mxu0 0
    %112 = vmatprep.subr.bf16.mxu0 0
    %113 = vmatpush1.bf16.msra.mxu0 0
    %114 = vmatprep.subr.bf16.mxu0 0
    %115 = vmatpush1.bf16.msra.mxu0 0
    %116 = vmatprep.subr.bf16.mxu0 0
    %117 = vmatpush1.bf16.msra.mxu0 0
    %118 = vmatprep.subr.bf16.mxu0 0
    %119 = vmatpush1.bf16.msra.mxu0 0
    %120 = vmatprep.subr.bf16.mxu0 0
    %121 = vmatpush1.bf16.msra.mxu0 0
    %122 = vmatprep.subr.bf16.mxu0 0
    %123 = vmatpush1.bf16.msra.mxu0 0
    %124 = vmatprep.subr.bf16.mxu0 0
    %125 = vmatpush1.bf16.msra.mxu0 0
    %126 = vmatprep.mubr.bf16.mxu0 0
    %127 = vmatmul.mubr.bf16.gmra.mrb[0].mxu0 %v89
    %v128 = vpop.f32.mrb[0].mxu0
    %v129 = vadd.f32 0.0, %v128
    %v130 = vpop.f32.mrb[0].mxu0
    %v131 = vpop.f32.mrb[0].mxu0
    %v132 = vadd.f32 0.0, %v131
    %v133 = vpop.f32.mrb[0].mxu0
    %134 = vmatprep.mubr.bf16.mxu0 0
    %135 = vmatmul.mubr.bf16.gmra.mrb[0].mxu0 %v92
    %v136 = vpop.f32.mrb[0].mxu0
    %v137 = vadd.f32 0.0, %v136
    %v138 = vpop.f32.mrb[0].mxu0
    %v139 = vpop.f32.mrb[0].mxu0
    %v140 = vadd.f32 0.0, %v139
    %v141 = vpop.f32.mrb[0].mxu0
    %142 = vdwg.mxu0
    %v143 = vadd.f32 %v53, %v129
    %v144 = vadd.f32 %v54, %v132
    %v145 = vadd.f32 %v55, %v137
    %v146 = vadd.f32 %v56, %v140
    %147 = vst.msk [vmem:[#allocation2] sm:$0xff] %vm87, %v143
    %148 = vst.msk [vmem:[#allocation2 + $0x8] sm:$0xff] %vm87, %v144
    %149 = vst.msk [vmem:[#allocation2 + $0x10] sm:$0xff] %vm87, %v145
    %150 = vst.msk [vmem:[#allocation2 + $0x18] sm:$0xff] %vm87, %v146
    // Predicated region
    $region26: #{tpu_custom_call.1} parent=1 // pred_check
      %p151 = pneg %p44
    $region27: #{tpu_custom_call.1} parent=1 // pred_check_branch
      %153 = sbr.rel (%p151) target = $region29
    $region28: #{tpu_custom_call.1} parent=1 // pred_region
      %v154 = vld [vmem:[#allocation2] sm:$0xff]
      %v155 = vld [vmem:[#allocation2 + $0x8] sm:$0xff]
      %v156 = vld [vmem:[#allocation2 + $0x10] sm:$0xff]
      %v157 = vld [vmem:[#allocation2 + $0x18] sm:$0xff]
      %v158 = vld [vmem:[%s2] sm:$0x1]
      %v160 = vlaneseq
      %v161 = vshrl.u32 %v160, 7
      %v162 = vsub.s32 0, %v161
      %v163 = vrot.slane %v158, %v162
      %v165 = vadd.f32 %v154, %v163
      %v166 = vadd.f32 %v155, %v163
      %v167 = vadd.f32 %v156, %v163
      %v168 = vadd.f32 %v157, %v163
      %v169 = vpack.c.bf16 %v166, %v165
      %v170 = vpack.c.bf16 %v168, %v167
      %v173 = vunpack.c.l.b16 %v169
      %v174 = vunpack.c.h.b16 %v169
      %v175 = vunpack.c.l.b16 %v170
      %v176 = vunpack.c.h.b16 %v170
      %v177 = vpack.c.b16 %v173, %v173
      %v178 = vpack.c.b16 %v174, %v174
      %v179 = vpack.c.b16 %v175, %v175
      %v180 = vpack.c.b16 %v176, %v176
      %vm185 = vcmask 257024
      %186 = vst.msk [vmem:[#allocation8] sm:$0xf] %vm185, %v177
      %187 = vst.msk [vmem:[#allocation8 + $0x4] sm:$0xf] %vm185, %v178
      %188 = vst.msk [vmem:[#allocation8 + $0x8] sm:$0xf] %vm185, %v179
      %189 = vst.msk [vmem:[#allocation8 + $0xc] sm:$0xf] %vm185, %v180
    $region29: #{tpu_custom_call.1} parent=1 // pred_fallthru
      _
    // Predicated region
    $region30: #{tpu_custom_call.1} parent=1 // pred_check
      _
    $region31: #{tpu_custom_call.1} parent=1 // pred_check_branch
      %191 = sbr.rel (0) target = $region33
    $region32: #{tpu_custom_call.1} parent=1 // pred_region
      %s193 = ssub.s32 256, 256
      %194 = vsyncadd [#allocation5], %s193
      %s195 = sshll.u32 [#allocation8], 4
      %s196 = int_to_ptr.vmem [resolvable:$true] %s195
      %201 = dma.vmem_to_hbm [thread:$0]  %s196, 256, %s3, [#allocation5], 64, 64, 4
    $region33: #{tpu_custom_call.1} parent=1 // pred_fallthru
      _
    // Predicated region
    $region34: #{tpu_custom_call.1} parent=1 // pred_check
      _
    $region35: #{tpu_custom_call.1} parent=1 // pred_check_branch
      %203 = sbr.rel (0) target = $region37
    $region36: #{tpu_custom_call.1} parent=1 // pred_region
      %204 = dma.done [#allocation5], 256
    $region37: #{tpu_custom_call.1} parent=1 // pred_fallthru
      _
    %205 = vsyncpa [#allocation4], 1
    %206 = vsyncpa [#allocation7], 1
    %207 = vsyncpa [#allocation5], 1

</llo_original>
